<compile_context>
chip_gen: v7x
topology: tpu7x:2x2x1
jax: 0.10.0
libtpu: 0.0.40
codegen_flags: <defaults>
</compile_context>

<pallas_src>
import jax
import jax.numpy as jnp
from jax.experimental import pallas as pl
from jax.experimental.pallas import tpu as pltpu


def _dense_act_dense_kernel(x_ref, wi_ref, wo_ref, o_ref, acc_ref):
    # x_ref:  (tm, d_model)       wi_ref: (tf, d_model)  -- PyTorch wi layout slice
    # wo_ref: (d_model, tf)       o_ref:  (tm, d_model)  -- PyTorch wo layout slice
    # acc_ref: (tm, d_model) f32
    j = pl.program_id(1)

    @pl.when(j == 0)
    def _():
        acc_ref[...] = jnp.zeros_like(acc_ref)

    # h = relu(x @ wi^T) for this d_ff slice; f32 accumulation on the MXU.
    h = jax.lax.dot_general(
        x_ref[...], wi_ref[...],
        dimension_numbers=(((1,), (1,)), ((), ())),
        preferred_element_type=jnp.float32,
    )
    h = jnp.maximum(h, 0.0)
    # TODO(synk): nn.Dropout is identity in eval/inference mode; training-mode
    # dropout (pltpu.prng_random_bits mask + scale) is intentionally not applied.

    # Match torch: the second linear runs in wo.weight dtype.
    acc_ref[...] += jax.lax.dot_general(
        h.astype(wo_ref.dtype), wo_ref[...],
        dimension_numbers=(((1,), (1,)), ((), ())),
        preferred_element_type=jnp.float32,
    )

    @pl.when(j == pl.num_programs(1) - 1)
    def _():
        o_ref[...] = acc_ref[...].astype(o_ref.dtype)


def _round_up(x, m):
    return (x + m - 1) // m * m


def _sublane_align(dtype):
    # min sublane multiple for packed dtypes: 8 (32-bit), 16 (bf16), 32 (8-bit)
    return {4: 8, 2: 16, 1: 32}.get(jnp.dtype(dtype).itemsize, 8)


def t5_dense_act_dense(hidden_states, wi_weight, wo_weight, *,
                       tile_rows=None, tile_ff=None):
    """Fused T5DenseActDense forward.

    hidden_states: (..., d_model)
    wi_weight: (d_ff, d_model)   -- PyTorch nn.Linear weight layout
    wo_weight: (d_model, d_ff)
    """
    orig_shape = hidden_states.shape
    d_model = orig_shape[-1]
    d_ff = wi_weight.shape[0]
    assert wi_weight.shape == (d_ff, d_model)
    assert wo_weight.shape == (d_model, d_ff)

    rows = 1
    for d in orig_shape[:-1]:
        rows *= d
    x2d = hidden_states.reshape(rows, d_model)

    out_dtype = wo_weight.dtype
    x_isz = jnp.dtype(hidden_states.dtype).itemsize
    wi_isz = jnp.dtype(wi_weight.dtype).itemsize
    wo_isz = jnp.dtype(wo_weight.dtype).itemsize
    out_isz = jnp.dtype(out_dtype).itemsize

    r_align = max(_sublane_align(hidden_states.dtype), _sublane_align(out_dtype))
    rows_rounded = _round_up(max(rows, 1), r_align)

    # ---- VMEM budget (chip-aware, with headroom under the physical limit) ----
    try:
        vmem_cap = int(pltpu.get_tpu_info().vmem_capacity_bytes)
    except Exception:
        vmem_cap = 64 * 1024 * 1024           # conservative (v7x-sized) fallback
    vmem_limit = max(32 * 1024 * 1024,
                     min(vmem_cap - 16 * 1024 * 1024, 100 * 1024 * 1024))
    usable = vmem_limit - 4 * 1024 * 1024     # room for Mosaic internal scratch

    def fits(tm_c, tf_c):
        acc_b = tm_c * d_model * 4
        x_b = 2 * tm_c * d_model * x_isz      # double-buffered
        out_b = 2 * tm_c * d_model * out_isz  # double-buffered
        wi_b = 2 * tf_c * d_model * wi_isz    # double-buffered
        wo_b = 2 * d_model * tf_c * wo_isz    # double-buffered
        return acc_b + x_b + out_b + wi_b + wo_b <= usable

    # d_ff tile candidates: whole d_ff first (weights become VMEM-resident and
    # are DMA'd exactly once), then lane-aligned divisors for streaming mode.
    if tile_ff is not None:
        assert d_ff % tile_ff == 0
        ff_cands = [tile_ff]
    else:
        ff_cands = [d_ff] + [c for c in (2048, 1024, 512, 256, 128)
                             if c < d_ff and d_ff % c == 0]

    tm_floor = min(128, rows_rounded)

    def pick_tm(tf_c):
        streaming = tf_c < d_ff
        # Streaming weights wants large row tiles (arithmetic intensity ~ tm);
        # resident weights only needs enough rows to keep the MXU busy.
        target = tile_rows if tile_rows is not None else (1024 if streaming else 512)
        tm_c = min(_round_up(target, r_align), rows_rounded)
        # Keep >= 2 row tiles when there is enough work so the "parallel" row
        # axis shards across both v7x TensorCores.
        if rows >= 256 and pl.cdiv(rows, tm_c) < 2:
            tm_c = _round_up(pl.cdiv(rows, 2), r_align)
        tm_c = max(tm_c, r_align)
        while tm_c > tm_floor and not fits(tm_c, tf_c):
            tm_c = max(_round_up(tm_c // 2, r_align), tm_floor)
        return tm_c

    tm = tf = None
    for tf_c in ff_cands:
        tm_c = pick_tm(tf_c)
        if fits(tm_c, tf_c):
            tm, tf = tm_c, tf_c
            break
    if tm is None:                            # last resort: smallest tiles
        tf = ff_cands[-1]
        tm = tm_floor

    grid = (pl.cdiv(rows, tm), d_ff // tf)

    flops = 4 * rows * d_model * d_ff         # two matmuls, 2 flops / MAC
    bytes_accessed = (rows * d_model * (x_isz + out_isz)
                      + d_ff * d_model * (wi_isz + wo_isz))

    out = pl.pallas_call(
        _dense_act_dense_kernel,
        out_shape=jax.ShapeDtypeStruct((rows, d_model), out_dtype),
        grid_spec=pltpu.PrefetchScalarGridSpec(
            num_scalar_prefetch=0,
            grid=grid,
            in_specs=[
                pl.BlockSpec((tm, d_model), lambda i, j: (i, 0)),   # x rows
                pl.BlockSpec((tf, d_model), lambda i, j: (j, 0)),   # wi rows (torch layout)
                pl.BlockSpec((d_model, tf), lambda i, j: (0, j)),   # wo cols (torch layout)
            ],
            out_specs=pl.BlockSpec((tm, d_model), lambda i, j: (i, 0)),
            scratch_shapes=[pltpu.VMEM((tm, d_model), jnp.float32)],
        ),
        compiler_params=pltpu.CompilerParams(
            dimension_semantics=("parallel", "arbitrary"),
            vmem_limit_bytes=vmem_limit,
        ),
        cost_estimate=pl.CostEstimate(
            flops=flops, transcendentals=0, bytes_accessed=bytes_accessed),
    )(x2d, wi_weight, wo_weight)

    return out.reshape(orig_shape[:-1] + (d_model,))


def _reference(hidden_states, wi_weight, wo_weight):
    h = jnp.einsum("...d,fd->...f", hidden_states, wi_weight)
    h = jnp.maximum(h, 0.0)
    h = h.astype(wo_weight.dtype)
    return jnp.einsum("...f,df->...d", h, wo_weight)


if __name__ == "__main__":
    key = jax.random.PRNGKey(0)
    k_x, k_wi, k_wo = jax.random.split(key, 3)

    batch, seq, d_model, d_ff = 2, 8, 32, 64

    x = jax.random.normal(k_x, (batch, seq, d_model), dtype=jnp.float32)
    wi_weight = jax.random.normal(k_wi, (d_ff, d_model), dtype=jnp.float32) * 0.05
    wo_weight = jax.random.normal(k_wo, (d_model, d_ff), dtype=jnp.float32) * 0.05

    out = t5_dense_act_dense(x, wi_weight, wo_weight)
    out = jax.block_until_ready(out)

    ref = _reference(x, wi_weight, wo_weight)
    assert out.shape == (batch, seq, d_model)
    assert jnp.allclose(out, ref, atol=1e-4, rtol=1e-4), "mismatch vs reference"

    print("KERNEL_OK")
</pallas_src>

<mosaic_0001>
module attributes {stable_mosaic.version = 11 : i64} {
  func.func @_dense_act_dense_kernel(%arg0: i32, %arg1: i32, %arg2: memref<16x32xf32, #tpu.memory_space<vmem>>, %arg3: memref<64x32xf32, #tpu.memory_space<vmem>>, %arg4: memref<32x64xf32, #tpu.memory_space<vmem>>, %arg5: memref<16x32xf32, #tpu.memory_space<vmem>>, %arg6: memref<16x32xf32, #tpu.memory_space<vmem>>) attributes {dimension_semantics = [#tpu.dimension_semantics<parallel>, #tpu.dimension_semantics<arbitrary>], iteration_bounds = array<i64: 1, 1>, scalar_prefetch = 0 : i64, scratch_operands = 1 : i64, tpu.core_type = #tpu.core_type<tc>, window_params = [{transform_indices = @transform_0, window_bounds = array<i64: 16, 32>}, {transform_indices = @transform_1, window_bounds = array<i64: 64, 32>}, {transform_indices = @transform_2, window_bounds = array<i64: 32, 64>}, {transform_indices = @transform_3, window_bounds = array<i64: 16, 32>}]} {
    %c0_i32 = arith.constant 0 : i32
    %0 = arith.cmpi eq, %arg1, %c0_i32 : i32
    %1 = arith.extui %0 : i1 to i32
    %c0_i32_0 = arith.constant 0 : i32
    %2 = arith.cmpi ne, %1, %c0_i32_0 : i32
    scf.if %2 {
      %cst_14 = arith.constant 0.000000e+00 : f32
      %16 = vector.broadcast %cst_14 : f32 to vector<16x32xf32>
      %c0_15 = arith.constant 0 : index
      %c0_16 = arith.constant 0 : index
      %17 = vector.load %arg6[%c0_15, %c0_16] : memref<16x32xf32, #tpu.memory_space<vmem>>, vector<16x32xf32>
      tpu.vector_store %arg6[%c0_15, %c0_16], %16 {strides = array<i32>} : memref<16x32xf32, #tpu.memory_space<vmem>>, vector<16x32xf32>,
    } else {
    }
    %c0 = arith.constant 0 : index
    %c0_1 = arith.constant 0 : index
    %3 = vector.load %arg2[%c0, %c0_1] : memref<16x32xf32, #tpu.memory_space<vmem>>, vector<16x32xf32>
    %c0_2 = arith.constant 0 : index
    %c0_3 = arith.constant 0 : index
    %4 = vector.load %arg3[%c0_2, %c0_3] : memref<64x32xf32, #tpu.memory_space<vmem>>, vector<64x32xf32>
    %cst = arith.constant dense<0.000000e+00> : vector<16x64xf32>
    %5 = tpu.matmul %3, %4, %cst {dimension_numbers = #tpu.dot_dimension_numbers<[1], [1], [0], [0], [0, 0, 1, 0], [], []>} : vector<16x32xf32>, vector<64x32xf32>, vector<16x64xf32> -> vector<16x64xf32>
    %cst_4 = arith.constant 0.000000e+00 : f32
    %6 = vector.broadcast %cst_4 : f32 to vector<16x64xf32>
    %7 = arith.maximumf %5, %6 : vector<16x64xf32>
    %c0_5 = arith.constant 0 : index
    %c0_6 = arith.constant 0 : index
    %8 = vector.load %arg6[%c0_5, %c0_6] : memref<16x32xf32, #tpu.memory_space<vmem>>, vector<16x32xf32>
    %c0_7 = arith.constant 0 : index
    %c0_8 = arith.constant 0 : index
    %9 = vector.load %arg4[%c0_7, %c0_8] : memref<32x64xf32, #tpu.memory_space<vmem>>, vector<32x64xf32>
    %cst_9 = arith.constant dense<0.000000e+00> : vector<16x32xf32>
    %10 = tpu.matmul %7, %9, %cst_9 {dimension_numbers = #tpu.dot_dimension_numbers<[1], [1], [0], [0], [0, 0, 1, 0], [], []>} : vector<16x64xf32>, vector<32x64xf32>, vector<16x32xf32> -> vector<16x32xf32>
    %11 = arith.addf %8, %10 : vector<16x32xf32>
    %c0_10 = arith.constant 0 : index
    %c0_11 = arith.constant 0 : index
    %12 = vector.load %arg6[%c0_10, %c0_11] : memref<16x32xf32, #tpu.memory_space<vmem>>, vector<16x32xf32>
    tpu.vector_store %arg6[%c0_10, %c0_11], %11 {strides = array<i32>} : memref<16x32xf32, #tpu.memory_space<vmem>>, vector<16x32xf32>,
    %c0_i32_12 = arith.constant 0 : i32
    %13 = arith.cmpi eq, %arg1, %c0_i32_12 : i32
    %14 = arith.extui %13 : i1 to i32
    %c0_i32_13 = arith.constant 0 : i32
    %15 = arith.cmpi ne, %14, %c0_i32_13 : i32
    scf.if %15 {
      %c0_14 = arith.constant 0 : index
      %c0_15 = arith.constant 0 : index
      %16 = vector.load %arg6[%c0_14, %c0_15] : memref<16x32xf32, #tpu.memory_space<vmem>>, vector<16x32xf32>
      %c0_16 = arith.constant 0 : index
      %c0_17 = arith.constant 0 : index
      %17 = vector.load %arg5[%c0_16, %c0_17] : memref<16x32xf32, #tpu.memory_space<vmem>>, vector<16x32xf32>
      tpu.vector_store %arg5[%c0_16, %c0_17], %16 {strides = array<i32>} : memref<16x32xf32, #tpu.memory_space<vmem>>, vector<16x32xf32>,
    } else {
    }
    return
  }
  func.func @transform_0(%arg0: i32, %arg1: i32) -> (i32, i32) {
    %c0_i32 = arith.constant 0 : i32
    %c0_i32_0 = arith.constant 0 : i32
    return %arg0, %c0_i32 : i32, i32
  }
  func.func @transform_1(%arg0: i32, %arg1: i32) -> (i32, i32) {
    %c0_i32 = arith.constant 0 : i32
    %c0_i32_0 = arith.constant 0 : i32
    return %arg1, %c0_i32 : i32, i32
  }
  func.func @transform_2(%arg0: i32, %arg1: i32) -> (i32, i32) {
    %c0_i32 = arith.constant 0 : i32
    %c0_i32_0 = arith.constant 0 : i32
    return %c0_i32, %arg1 : i32, i32
  }
  func.func @transform_3(%arg0: i32, %arg1: i32) -> (i32, i32) {
    %c0_i32 = arith.constant 0 : i32
    %c0_i32_0 = arith.constant 0 : i32
    return %arg0, %c0_i32 : i32, i32
  }
}

</mosaic_0001>

<llo_original>
// kernel: tpu_custom_call.1
$region0: #{tpu_custom_call.1}
  #allocation0 [shape = 'u32[]', space=smem, size = 0x4, offset = 0x4, fixed_abs, tag = 'smem constant byte address 0x4 - core index']
  #allocation1 [shape = 'u32[144,128]{1,0:T(1,128)}', space=vmem, size = 0x12000, scoped, tag = 'internal scratch']
  #allocation2 [shape = 'f32[16,32]{1,0:T(8,128)}', space=vmem, size = 0x2000, scoped, tag = 'scratch operand']
  %s0 = inlined_call_operand.vmem [shape: f32[16,32], index: 0, kind: input, shape index: {}]
  %s1 = inlined_call_operand.vmem [shape: f32[64,32], index: 1, kind: input, shape index: {}]
  %s2 = inlined_call_operand.vmem [shape: f32[32,64], index: 2, kind: input, shape index: {}]
  %s3 = inlined_call_operand.hbm [shape: f32[16,32], index: 3, kind: output, shape index: {}]
  %s4 = sld [smem:[#allocation0]]
  $region30: #{tpu_custom_call.1} parent=0
    _
  %s6 = ssub.s32 1, %s4
  %s7 = scalar_select 0, %s6, %s4
  $region1: #{tpu_custom_call.1} parent=0
    #allocation3 [shape = 'u8[8192]{0}', space=vmem, size = 0x2000, scoped, tag = 'output window, operand 0, single buffered']
    #allocation4 [shape = 's32[1]{0}', space=sflag, size = 0x4, scoped, tag = 'scoped memory for tpu_custom_call.1']
    %8 = vsyncpa [#allocation4], 0
    // Predicated region
    $region2: #{tpu_custom_call.1} parent=1 // pred_check
      _
    $region3: #{tpu_custom_call.1} parent=1 // pred_check_branch
      %10 = sbr.rel (0) target = $region5
    $region4: #{tpu_custom_call.1} parent=1 // pred_region
      _
    $region5: #{tpu_custom_call.1} parent=1 // pred_fallthru
      _
    // Predicated region
    $region6: #{tpu_custom_call.1} parent=1 // pred_check
      _
    $region7: #{tpu_custom_call.1} parent=1 // pred_check_branch
      %12 = sbr.rel (0) target = $region9
    $region8: #{tpu_custom_call.1} parent=1 // pred_region
      _
    $region9: #{tpu_custom_call.1} parent=1 // pred_fallthru
      _
    // Predicated region
    $region10: #{tpu_custom_call.1} parent=1 // pred_check
      _
    $region11: #{tpu_custom_call.1} parent=1 // pred_check_branch
      %14 = sbr.rel (0) target = $region13
    $region12: #{tpu_custom_call.1} parent=1 // pred_region
      _
    $region13: #{tpu_custom_call.1} parent=1 // pred_fallthru
      _
    %p15 = scmp.eq.s32.totalorder 0, 0
    // Predicated region
    $region14: #{tpu_custom_call.1} parent=1 // pred_check
      %p16 = pneg %p15
    $region15: #{tpu_custom_call.1} parent=1 // pred_check_branch
      %18 = sbr.rel (%p16) target = $region17
    $region16: #{tpu_custom_call.1} parent=1 // pred_region
      %vm19 = vcmask 261120
      %20 = vst.msk [vmem:[#allocation2] sm:$0xff] %vm19, 0.0
      %21 = vst.msk [vmem:[#allocation2 + $0x8] sm:$0xff] %vm19, 0.0
    $region17: #{tpu_custom_call.1} parent=1 // pred_fallthru
      _
    %v22 = vld [vmem:[%s0] sm:$0xff]
    %v23 = vld [vmem:[%s0 + $0x8] sm:$0xff]
    %v24 = vld [vmem:[%s1] sm:$0xff]
    %v25 = vld [vmem:[%s1 + $0x8] sm:$0xff]
    %v26 = vld [vmem:[%s1 + $0x10] sm:$0xff]
    %v27 = vld [vmem:[%s1 + $0x18] sm:$0xff]
    %v28 = vld [vmem:[%s1 + $0x20] sm:$0xff]
    %v29 = vld [vmem:[%s1 + $0x28] sm:$0xff]
    %v30 = vld [vmem:[%s1 + $0x30] sm:$0xff]
    %v31 = vld [vmem:[%s1 + $0x38] sm:$0xff]
    %vm32 = vcmask 261120
    %v34 = vsel %vm32, %v22, 0
    %v37 = vsel %vm32, %v23, 0
    %v40 = vsel %vm32, %v24, 0
    %v43 = vsel %vm32, %v25, 0
    %v46 = vsel %vm32, %v26, 0
    %v49 = vsel %vm32, %v27, 0
    %v52 = vsel %vm32, %v28, 0
    %v55 = vsel %vm32, %v29, 0
    %v58 = vsel %vm32, %v30, 0
    %v61 = vsel %vm32, %v31, 0
    %63 = vmatprep.subr.mxu0 0.0
    %64 = vmatpush1.xpose.msra.mxu0 %v40
    %65 = vmatprep.subr.mxu0 0.0
    %66 = vmatpush1.xpose.msra.mxu0 %v43
    %67 = vmatprep.subr.mxu0 0.0
    %68 = vmatpush1.xpose.msra.mxu0 %v46
    %69 = vmatprep.subr.mxu0 0.0
    %70 = vmatpush1.xpose.msra.mxu0 %v49
    %71 = vmatprep.subr.mxu0 0.0
    %72 = vmatpush1.xpose.msra.mxu0 %v52
    %73 = vmatprep.subr.mxu0 0.0
    %74 = vmatpush1.xpose.msra.mxu0 %v55
    %75 = vmatprep.subr.mxu0 0.0
    %76 = vmatpush1.xpose.msra.mxu0 %v58
    %77 = vmatprep.subr.mxu0 0.0
    %78 = vmatpush1.xpose.msra.mxu0 %v61
    %79 = vmatprep.subr.mxu0 0.0
    %80 = vmatpush1.xpose.msra.mxu0 0.0
    %81 = vmatprep.subr.mxu0 0.0
    %82 = vmatpush1.xpose.msra.mxu0 0.0
    %83 = vmatprep.subr.mxu0 0.0
    %84 = vmatpush1.xpose.msra.mxu0 0.0
    %85 = vmatprep.subr.mxu0 0.0
    %86 = vmatpush1.xpose.msra.mxu0 0.0
    %87 = vmatprep.subr.mxu0 0.0
    %88 = vmatpush1.xpose.msra.mxu0 0.0
    %89 = vmatprep.subr.mxu0 0.0
    %90 = vmatpush1.xpose.msra.mxu0 0.0
    %91 = vmatprep.subr.mxu0 0.0
    %92 = vmatpush1.xpose.msra.mxu0 0.0
    %93 = vmatprep.subr.mxu0 0.0
    %94 = vmatpush1.xpose.msra.mxu0 0.0
    %95 = vmatprep.subr.mxu0 0.0
    %96 = vmatpush1.xpose.msra.mxu0 0.0
    %97 = vmatprep.subr.mxu0 0.0
    %98 = vmatpush1.xpose.msra.mxu0 0.0
    %99 = vmatprep.subr.mxu0 0.0
    %100 = vmatpush1.xpose.msra.mxu0 0.0
    %101 = vmatprep.subr.mxu0 0.0
    %102 = vmatpush1.xpose.msra.mxu0 0.0
    %103 = vmatprep.subr.mxu0 0.0
    %104 = vmatpush1.xpose.msra.mxu0 0.0
    %105 = vmatprep.subr.mxu0 0.0
    %106 = vmatpush1.xpose.msra.mxu0 0.0
    %107 = vmatprep.subr.mxu0 0.0
    %108 = vmatpush1.xpose.msra.mxu0 0.0
    %109 = vmatprep.subr.mxu0 0.0
    %110 = vmatpush1.xpose.msra.mxu0 0.0
    %111 = vmatprep.subr.mxu0 0.0
    %112 = vmatpush1.xpose.msra.mxu0 0.0
    %113 = vmatprep.subr.mxu0 0.0
    %114 = vmatpush1.xpose.msra.mxu0 0.0
    %115 = vmatprep.subr.mxu0 0.0
    %116 = vmatpush1.xpose.msra.mxu0 0.0
    %117 = vmatprep.subr.mxu0 0.0
    %118 = vmatpush1.xpose.msra.mxu0 0.0
    %119 = vmatprep.subr.mxu0 0.0
    %120 = vmatpush1.xpose.msra.mxu0 0.0
    %121 = vmatprep.subr.mxu0 0.0
    %122 = vmatpush1.xpose.msra.mxu0 0.0
    %123 = vmatprep.subr.mxu0 0.0
    %124 = vmatpush1.xpose.msra.mxu0 0.0
    %125 = vmatprep.subr.mxu0 0.0
    %126 = vmatpush1.xpose.msra.mxu0 0.0
    %127 = vmatprep.mubr.f32.mxu0 0.0
    %128 = vmatmul.mubr.f32.gmra.mrb[0].mxu0 %v34
    %v129 = vpop.f32.mrb[0].mxu0
    %v130 = vadd.f32 0.0, %v129
    %v131 = vpop.f32.mrb[0].mxu0
    %132 = vmatprep.mubr.f32.mxu0 0.0
    %133 = vmatmul.mubr.f32.gmra.mrb[0].mxu0 %v37
    %v134 = vpop.f32.mrb[0].mxu0
    %v135 = vadd.f32 0.0, %v134
    %v136 = vpop.f32.mrb[0].mxu0
    %137 = vdwg.mxu0
    %v138 = vmax.f32 %v130, 0.0
    %v139 = vmax.f32 %v135, 0.0
    %v140 = vld [vmem:[#allocation2] sm:$0xff]
    %v141 = vld [vmem:[#allocation2 + $0x8] sm:$0xff]
    %v142 = vld [vmem:[%s2] sm:$0xff]
    %v143 = vld [vmem:[%s2 + $0x8] sm:$0xff]
    %v144 = vld [vmem:[%s2 + $0x10] sm:$0xff]
    %v145 = vld [vmem:[%s2 + $0x18] sm:$0xff]
    %vm146 = vcmask 523264
    %v148 = vsel %vm146, %v138, 0
    %v151 = vsel %vm146, %v139, 0
    %v154 = vsel %vm146, %v142, 0
    %v157 = vsel %vm146, %v143, 0
    %v160 = vsel %vm146, %v144, 0
    %v163 = vsel %vm146, %v145, 0
    %165 = vmatprep.subr.mxu0 0.0
    %166 = vmatpush1.xpose.msra.mxu0 %v154
    %167 = vmatprep.subr.mxu0 0.0
    %168 = vmatpush1.xpose.msra.mxu0 %v157
    %169 = vmatprep.subr.mxu0 0.0
    %170 = vmatpush1.xpose.msra.mxu0 %v160
    %171 = vmatprep.subr.mxu0 0.0
    %172 = vmatpush1.xpose.msra.mxu0 %v163
    %173 = vmatprep.subr.mxu0 0.0
    %174 = vmatpush1.xpose.msra.mxu0 0.0
    %175 = vmatprep.subr.mxu0 0.0
    %176 = vmatpush1.xpose.msra.mxu0 0.0
    %177 = vmatprep.subr.mxu0 0.0
    %178 = vmatpush1.xpose.msra.mxu0 0.0
    %179 = vmatprep.subr.mxu0 0.0
    %180 = vmatpush1.xpose.msra.mxu0 0.0
    %181 = vmatprep.subr.mxu0 0.0
    %182 = vmatpush1.xpose.msra.mxu0 0.0
    %183 = vmatprep.subr.mxu0 0.0
    %184 = vmatpush1.xpose.msra.mxu0 0.0
    %185 = vmatprep.subr.mxu0 0.0
    %186 = vmatpush1.xpose.msra.mxu0 0.0
    %187 = vmatprep.subr.mxu0 0.0
    %188 = vmatpush1.xpose.msra.mxu0 0.0
    %189 = vmatprep.subr.mxu0 0.0
    %190 = vmatpush1.xpose.msra.mxu0 0.0
    %191 = vmatprep.subr.mxu0 0.0
    %192 = vmatpush1.xpose.msra.mxu0 0.0
    %193 = vmatprep.subr.mxu0 0.0
    %194 = vmatpush1.xpose.msra.mxu0 0.0
    %195 = vmatprep.subr.mxu0 0.0
    %196 = vmatpush1.xpose.msra.mxu0 0.0
    %197 = vmatprep.subr.mxu0 0.0
    %198 = vmatpush1.xpose.msra.mxu0 0.0
    %199 = vmatprep.subr.mxu0 0.0
    %200 = vmatpush1.xpose.msra.mxu0 0.0
    %201 = vmatprep.subr.mxu0 0.0
    %202 = vmatpush1.xpose.msra.mxu0 0.0
    %203 = vmatprep.subr.mxu0 0.0
    %204 = vmatpush1.xpose.msra.mxu0 0.0
    %205 = vmatprep.subr.mxu0 0.0
    %206 = vmatpush1.xpose.msra.mxu0 0.0
    %207 = vmatprep.subr.mxu0 0.0
    %208 = vmatpush1.xpose.msra.mxu0 0.0
    %209 = vmatprep.subr.mxu0 0.0
    %210 = vmatpush1.xpose.msra.mxu0 0.0
    %211 = vmatprep.subr.mxu0 0.0
    %212 = vmatpush1.xpose.msra.mxu0 0.0
    %213 = vmatprep.subr.mxu0 0.0
    %214 = vmatpush1.xpose.msra.mxu0 0.0
    %215 = vmatprep.subr.mxu0 0.0
    %216 = vmatpush1.xpose.msra.mxu0 0.0
    %217 = vmatprep.subr.mxu0 0.0
    %218 = vmatpush1.xpose.msra.mxu0 0.0
    %219 = vmatprep.subr.mxu0 0.0
    %220 = vmatpush1.xpose.msra.mxu0 0.0
    %221 = vmatprep.subr.mxu0 0.0
    %222 = vmatpush1.xpose.msra.mxu0 0.0
    %223 = vmatprep.subr.mxu0 0.0
    %224 = vmatpush1.xpose.msra.mxu0 0.0
    %225 = vmatprep.subr.mxu0 0.0
    %226 = vmatpush1.xpose.msra.mxu0 0.0
    %227 = vmatprep.subr.mxu0 0.0
    %228 = vmatpush1.xpose.msra.mxu0 0.0
    %229 = vmatprep.mubr.f32.mxu0 0.0
    %230 = vmatmul.mubr.f32.gmra.mrb[0].mxu0 %v148
    %v231 = vpop.f32.mrb[0].mxu0
    %v232 = vadd.f32 0.0, %v231
    %v233 = vpop.f32.mrb[0].mxu0
    %234 = vmatprep.mubr.f32.mxu0 0.0
    %235 = vmatmul.mubr.f32.gmra.mrb[0].mxu0 %v151
    %v236 = vpop.f32.mrb[0].mxu0
    %v237 = vadd.f32 0.0, %v236
    %v238 = vpop.f32.mrb[0].mxu0
    %239 = vdwg.mxu0
    %v240 = vadd.f32 %v140, %v232
    %v241 = vadd.f32 %v141, %v237
    %242 = vst.msk [vmem:[#allocation2] sm:$0xff] %vm32, %v240
    %243 = vst.msk [vmem:[#allocation2 + $0x8] sm:$0xff] %vm32, %v241
    // Predicated region
    $region18: #{tpu_custom_call.1} parent=1 // pred_check
      %p244 = pneg %p15
    $region19: #{tpu_custom_call.1} parent=1 // pred_check_branch
      %246 = sbr.rel (%p244) target = $region21
    $region20: #{tpu_custom_call.1} parent=1 // pred_region
      %v247 = vld [vmem:[#allocation2] sm:$0xff]
      %v248 = vld [vmem:[#allocation2 + $0x8] sm:$0xff]
      %249 = vst.msk [vmem:[#allocation3] sm:$0xff] %vm32, %v247
      %250 = vst.msk [vmem:[#allocation3 + $0x8] sm:$0xff] %vm32, %v248
    $region21: #{tpu_custom_call.1} parent=1 // pred_fallthru
      _
    // Predicated region
    $region22: #{tpu_custom_call.1} parent=1 // pred_check
      _
    $region23: #{tpu_custom_call.1} parent=1 // pred_check_branch
      %252 = sbr.rel (0) target = $region25
    $region24: #{tpu_custom_call.1} parent=1 // pred_region
      %s254 = ssub.s32 256, 256
      %255 = vsyncadd [#allocation4], %s254
      %s256 = sshll.u32 [#allocation3], 4
      %s257 = int_to_ptr.vmem [resolvable:$true] %s256
      %262 = dma.vmem_to_hbm [thread:$0]  %s257, 256, %s3, [#allocation4], 128, 128, 8
    $region25: #{tpu_custom_call.1} parent=1 // pred_fallthru
      _
    // Predicated region
    $region26: #{tpu_custom_call.1} parent=1 // pred_check
      _
    $region27: #{tpu_custom_call.1} parent=1 // pred_check_branch
      %264 = sbr.rel (0) target = $region29
    $region28: #{tpu_custom_call.1} parent=1 // pred_region
      %265 = dma.done [#allocation4], 256
    $region29: #{tpu_custom_call.1} parent=1 // pred_fallthru
      _
    %266 = vsyncpa [#allocation4], 1

</llo_original>
